<compile_context>
chip_gen: v6e
topology: v6e:2x2x1
jax: 0.10.0
libtpu: 0.0.40
codegen_flags: <defaults>
</compile_context>

<pallas_src>
import jax
import jax.numpy as jnp
from jax.experimental import pallas as pl
from jax.experimental.pallas import tpu as pltpu

_LANE = 128


def _round_up(x, m):
    return (x + m - 1) // m * m


def satnet_kernel(x_ref, w_ref, b_ref, o_ref):
    # Single fused MXU matmul (f32 accumulation) + bias + ReLU.
    y = jnp.dot(x_ref[...], w_ref[...], preferred_element_type=jnp.float32)
    y = y + b_ref[...]
    o_ref[...] = jnp.maximum(y, 0.0).astype(o_ref.dtype)


def init_satnet_params(key, num_inputs, hidden_size=32, out_dim=3,
                       dtype=jnp.float32):
    """nn.Linear-style init (uniform +/- 1/sqrt(fan_in)); weights stored
    pre-transposed relative to PyTorch: w1 (in, hidden), w2 (hidden, out)."""
    k1, k2, k3, k4 = jax.random.split(key, 4)
    bound1 = 1.0 / jnp.sqrt(num_inputs)
    bound2 = 1.0 / jnp.sqrt(hidden_size)
    w1 = jax.random.uniform(k1, (num_inputs, hidden_size), dtype,
                            minval=-bound1, maxval=bound1)
    b1 = jax.random.uniform(k2, (1, hidden_size), dtype,
                            minval=-bound1, maxval=bound1)
    w2 = jax.random.uniform(k3, (hidden_size, out_dim), dtype,
                            minval=-bound2, maxval=bound2)
    b2 = jax.random.uniform(k4, (1, out_dim), dtype,
                            minval=-bound2, maxval=bound2)
    return w1, b1, w2, b2


def fuse_satnet_params(w1, b1, w2, b2, *, batch_hint=None, max_pack=32):
    """One-time (hoisted) fusion of the two Linears and row-packing of the
    fused weight.  Returns (W_bd, b_bd, pack, out_dim)."""
    num_inputs, hidden = w1.shape
    out_dim = w2.shape[1]
    assert out_dim <= _LANE
    w_f = jnp.dot(w1.astype(jnp.float32), w2.astype(jnp.float32))           # (K, out)
    b_f = (jnp.dot(b1.reshape(1, hidden).astype(jnp.float32),
                   w2.astype(jnp.float32))
           + b2.reshape(1, out_dim).astype(jnp.float32))                    # (1, out)

    # Pick pack: `pack` logical rows share one 128-lane row, each getting
    # og = 128 // pack lanes.  Need og >= out_dim; keep pack*K modest; prefer
    # pack dividing the expected batch so the hot path needs no JAX tail.
    pack = 1
    for p in (128, 64, 32, 16, 8, 4, 2, 1):
        og = _LANE // p
        if og < out_dim or p > max_pack or p * num_inputs > 4096:
            continue
        if batch_hint is not None and batch_hint % p != 0:
            continue
        pack = p
        break
    og = _LANE // pack
    w_g = jnp.pad(w_f, ((0, 0), (0, og - out_dim)))                 # (K, og)
    b_g = jnp.pad(b_f, ((0, 0), (0, og - out_dim)))                 # (1, og)
    W_bd = jnp.kron(jnp.eye(pack, dtype=jnp.float32), w_g)          # (pack*K, 128)
    b_bd = jnp.tile(b_g, (1, pack))                                 # (1, 128)
    return W_bd, b_bd, pack, out_dim


def satnet_forward(x, W_bd, b_bd, pack, out_dim, *, single_output=False,
                   vmem_budget_bytes=8 * 1024 * 1024):
    """y = relu((x @ w1 + b1) @ w2 + b2) using fused, row-packed params."""
    B, K = x.shape
    og = _LANE // pack
    assert W_bd.shape == (pack * K, _LANE)
    out_dtype = x.dtype
    isz = jnp.dtype(out_dtype).itemsize
    sub = 8 * (4 // isz)          # sublane multiple: 8 (f32) / 16 (bf16) / 32 (8-bit)

    pieces = []
    B_main = (B // pack) * pack
    if B_main > 0:
        G = B_main // pack
        xp = (x if B_main == B else x[:B_main]).reshape(G, pack * K)

        # Byte-budget the (x + out) block against scoped VMEM (x2 for double
        # buffering stays < 32 MiB on all gens incl. v7x) and aim for >= 2
        # grid steps so v7x megacore shards the batch axis.
        row_bytes = (pack * K + _LANE) * isz
        cap_g = max(sub, (vmem_budget_bytes // row_bytes) // sub * sub)
        tile_g = min(cap_g, _round_up(pl.cdiv(G, 2), sub))
        tile_g = max(sub, tile_g)
        if tile_g >= G:
            tile_g = G            # full-extent block (always a legal shape)
        grid = (pl.cdiv(G, tile_g),)   # ragged last block masked by Pallas

        cost = pl.CostEstimate(        # logical (unpadded) numbers
            flops=2 * B_main * K * out_dim,
            transcendentals=0,
            bytes_accessed=(B_main * K * isz + B_main * out_dim * isz
                            + K * out_dim * 4 + out_dim * 4),
        )

        out_packed = pl.pallas_call(
            satnet_kernel,
            out_shape=jax.ShapeDtypeStruct((G, _LANE), out_dtype),
            grid_spec=pltpu.PrefetchScalarGridSpec(
                num_scalar_prefetch=0,
                grid=grid,
                in_specs=[
                    pl.BlockSpec((tile_g, pack * K), lambda i: (i, 0)),  # packed x (streamed)
                    pl.BlockSpec((pack * K, _LANE), lambda i: (0, 0)),   # fused weight (resident)
                    pl.BlockSpec((1, _LANE), lambda i: (0, 0)),          # fused bias (resident)
                ],
                out_specs=pl.BlockSpec((tile_g, _LANE), lambda i: (i, 0)),
            ),
            compiler_params=pltpu.CompilerParams(
                dimension_semantics=("parallel",),
                vmem_limit_bytes=32 * 1024 * 1024,
            ),
            cost_estimate=cost,
        )(xp, W_bd, b_bd)
        pieces.append(out_packed.reshape(B_main, og)[:, :out_dim])

    if B_main < B:
        # Tiny ragged tail (< pack rows): plain JAX with the same fused math.
        w_g = W_bd[:K, :og]
        b_g = b_bd[:, :og]
        tail = jnp.maximum(jnp.dot(x[B_main:].astype(jnp.float32), w_g) + b_g, 0.0)
        pieces.append(tail[:, :out_dim].astype(out_dtype))

    out = pieces[0] if len(pieces) == 1 else jnp.concatenate(pieces, axis=0)
    if single_output:
        assert out_dim == 1, "single_output requires out_dim == 1"
        out = jnp.squeeze(out, -1)
    return out


if __name__ == "__main__":
    key = jax.random.PRNGKey(0)
    k_params, k_x = jax.random.split(key)

    batch = 64
    num_inputs = 16
    hidden_size = 32
    single_output = False
    out_dim = 1 if single_output else 3
    # TODO(synk): the PyTorch module's unused `output_index` attribute has no
    # effect on forward() and is intentionally not modeled.

    w1, b1, w2, b2 = init_satnet_params(k_params, num_inputs, hidden_size, out_dim)
    x = jax.random.normal(k_x, (batch, num_inputs), jnp.float32)

    # One-time parameter fusion + row-packing (hoisted out of the hot path).
    W_bd, b_bd, pack, out_dim = fuse_satnet_params(w1, b1, w2, b2, batch_hint=batch)

    out = satnet_forward(x, W_bd, b_bd, pack, out_dim, single_output=single_output)
    out = jax.block_until_ready(out)

    # Pure-JAX reference (same math as the PyTorch module).
    ref = jnp.maximum((x @ w1 + b1) @ w2 + b2, 0.0)
    assert out.shape == (batch, out_dim)
    assert jnp.allclose(out, ref, atol=1e-4, rtol=1e-4)

    print("KERNEL_OK")
</pallas_src>

<mosaic_0001>
module attributes {stable_mosaic.version = 11 : i64} {
  func.func @satnet_kernel(%arg0: i32, %arg1: memref<2x512xf32, #tpu.memory_space<vmem>>, %arg2: memref<512x128xf32, #tpu.memory_space<vmem>>, %arg3: memref<1x128xf32, #tpu.memory_space<vmem>>, %arg4: memref<2x128xf32, #tpu.memory_space<vmem>>) attributes {dimension_semantics = [#tpu.dimension_semantics<parallel>], iteration_bounds = array<i64: 1>, scalar_prefetch = 0 : i64, scratch_operands = 0 : i64, tpu.core_type = #tpu.core_type<tc>, window_params = [{transform_indices = @transform_0, window_bounds = array<i64: 2, 512>}, {pipeline_mode = #tpu.pipeline_mode<synchronous>, transform_indices = @transform_1, window_bounds = array<i64: 512, 128>}, {pipeline_mode = #tpu.pipeline_mode<synchronous>, transform_indices = @transform_2, window_bounds = array<i64: 1, 128>}, {transform_indices = @transform_3, window_bounds = array<i64: 2, 128>}]} {
    %c0 = arith.constant 0 : index
    %c0_0 = arith.constant 0 : index
    %0 = vector.load %arg1[%c0, %c0_0] : memref<2x512xf32, #tpu.memory_space<vmem>>, vector<2x512xf32>
    %c0_1 = arith.constant 0 : index
    %c0_2 = arith.constant 0 : index
    %1 = vector.load %arg2[%c0_1, %c0_2] : memref<512x128xf32, #tpu.memory_space<vmem>>, vector<512x128xf32>
    %cst = arith.constant dense<0.000000e+00> : vector<2x128xf32>
    %2 = tpu.matmul %0, %1, %cst {dimension_numbers = #tpu.dot_dimension_numbers<[1], [0], [0], [1], [0, 0, 1, 1], [], []>} : vector<2x512xf32>, vector<512x128xf32>, vector<2x128xf32> -> vector<2x128xf32>
    %c0_3 = arith.constant 0 : index
    %c0_4 = arith.constant 0 : index
    %3 = vector.load %arg3[%c0_3, %c0_4] : memref<1x128xf32, #tpu.memory_space<vmem>>, vector<1x128xf32>
    %4 = vector.broadcast %3 : vector<1x128xf32> to vector<2x128xf32>
    %5 = arith.addf %2, %4 : vector<2x128xf32>
    %cst_5 = arith.constant 0.000000e+00 : f32
    %6 = vector.broadcast %cst_5 : f32 to vector<2x128xf32>
    %7 = arith.maximumf %5, %6 : vector<2x128xf32>
    %c0_6 = arith.constant 0 : index
    %c0_7 = arith.constant 0 : index
    %8 = vector.load %arg4[%c0_6, %c0_7] : memref<2x128xf32, #tpu.memory_space<vmem>>, vector<2x128xf32>
    tpu.vector_store %arg4[%c0_6, %c0_7], %7 {strides = array<i32>} : memref<2x128xf32, #tpu.memory_space<vmem>>, vector<2x128xf32>,
    return
  }
  func.func @transform_0(%arg0: i32) -> (i32, i32) {
    %c0_i32 = arith.constant 0 : i32
    %c0_i32_0 = arith.constant 0 : i32
    return %arg0, %c0_i32 : i32, i32
  }
  func.func @transform_1(%arg0: i32) -> (i32, i32) {
    %c0_i32 = arith.constant 0 : i32
    %c0_i32_0 = arith.constant 0 : i32
    %c0_i32_1 = arith.constant 0 : i32
    return %c0_i32, %c0_i32_0 : i32, i32
  }
  func.func @transform_2(%arg0: i32) -> (i32, i32) {
    %c0_i32 = arith.constant 0 : i32
    %c0_i32_0 = arith.constant 0 : i32
    %c0_i32_1 = arith.constant 0 : i32
    return %c0_i32, %c0_i32_0 : i32, i32
  }
  func.func @transform_3(%arg0: i32) -> (i32, i32) {
    %c0_i32 = arith.constant 0 : i32
    %c0_i32_0 = arith.constant 0 : i32
    return %arg0, %c0_i32 : i32, i32
  }
}

</mosaic_0001>

<llo_original>
// kernel: tpu_custom_call.1
$region0: #{tpu_custom_call.1}
  #allocation0 [shape = 'u32[]', space=smem, size = 0x4, offset = 0x4, fixed_abs, tag = 'smem constant byte address 0x4 - core index']
  #allocation1 [shape = 'u32[144,128]{1,0:T(1,128)}', space=vmem, size = 0x12000, scoped, tag = 'internal scratch']
  %s0 = inlined_call_operand.hbm [shape: f32[2,512], index: 0, kind: input, shape index: {}]
  %s1 = inlined_call_operand.hbm [shape: f32[512,128], index: 1, kind: input, shape index: {}]
  %s2 = inlined_call_operand.vmem [shape: f32[1,128], index: 2, kind: input, shape index: {}]
  %s3 = inlined_call_operand.hbm [shape: f32[2,128], index: 3, kind: output, shape index: {}]
  %s4 = sld [smem:[#allocation0]]
  $region30: #{tpu_custom_call.1} parent=0
    _
  %s6 = ssub.s32 1, %s4
  %s7 = scalar_select 0, %s6, %s4
  $region1: #{tpu_custom_call.1} parent=0
    #allocation2 [shape = 'u8[4096]{0}', space=vmem, size = 0x1000, scoped, tag = 'input window, operand 0, single buffered']
    #allocation3 [shape = 's32[1]{0}', space=sflag, size = 0x4, scoped, tag = 'scoped memory for tpu_custom_call.1']
    #allocation4 [shape = 's32[1]{0}', space=sflag, size = 0x4, scoped, tag = 'scoped memory for tpu_custom_call.1']
    #allocation5 [shape = 'u8[262144]{0}', space=vmem, size = 0x40000, scoped, tag = 'input window, operand 1, single buffered']
    #allocation6 [shape = 's32[1]{0}', space=sflag, size = 0x4, scoped, tag = 'scoped memory for tpu_custom_call.1']
    #allocation7 [shape = 'u8[1024]{0}', space=vmem, size = 0x400, scoped, tag = 'output window, operand 0, single buffered']
    %8 = vsyncpa [#allocation3], 0
    %9 = vsyncpa [#allocation6], 0
    %10 = vsyncpa [#allocation4], 0
    // Predicated region
    $region2: #{tpu_custom_call.1} parent=1 // pred_check
      _
    $region3: #{tpu_custom_call.1} parent=1 // pred_check_branch
      %12 = sbr.rel (0) target = $region5
    $region4: #{tpu_custom_call.1} parent=1 // pred_region
      %s14 = ssub.s32 128, 128
      %15 = vsyncadd [#allocation3], %s14
      %s17 = sshll.u32 [#allocation2], 4
      %s18 = int_to_ptr.vmem [resolvable:$true] %s17
      %20 = dma.hbm_to_vmem [thread:$0]  %s0, 128, %s18, [#allocation3]
    $region5: #{tpu_custom_call.1} parent=1 // pred_fallthru
      _
    // Predicated region
    $region6: #{tpu_custom_call.1} parent=1 // pred_check
      _
    $region7: #{tpu_custom_call.1} parent=1 // pred_check_branch
      %22 = sbr.rel (0) target = $region9
    $region8: #{tpu_custom_call.1} parent=1 // pred_region
      %s24 = ssub.s32 8192, 8192
      %25 = vsyncadd [#allocation6], %s24
      %s26 = sshll.u32 [#allocation5], 4
      %s27 = int_to_ptr.vmem [resolvable:$true] %s26
      %32 = dma.hbm_to_vmem [thread:$0]  %s1, 8192, %s27, [#allocation6], 128, 128, 8
    $region9: #{tpu_custom_call.1} parent=1 // pred_fallthru
      _
    // Predicated region
    $region10: #{tpu_custom_call.1} parent=1 // pred_check
      _
    $region11: #{tpu_custom_call.1} parent=1 // pred_check_branch
      %34 = sbr.rel (0) target = $region13
    $region12: #{tpu_custom_call.1} parent=1 // pred_region
      _
    $region13: #{tpu_custom_call.1} parent=1 // pred_fallthru
      _
    // Predicated region
    $region14: #{tpu_custom_call.1} parent=1 // pred_check
      _
    $region15: #{tpu_custom_call.1} parent=1 // pred_check_branch
      %36 = sbr.rel (0) target = $region17
    $region16: #{tpu_custom_call.1} parent=1 // pred_region
      %37 = dma.done [#allocation3], 128
    $region17: #{tpu_custom_call.1} parent=1 // pred_fallthru
      _
    // Predicated region
    $region18: #{tpu_custom_call.1} parent=1 // pred_check
      _
    $region19: #{tpu_custom_call.1} parent=1 // pred_check_branch
      %39 = sbr.rel (0) target = $region21
    $region20: #{tpu_custom_call.1} parent=1 // pred_region
      %40 = dma.done [#allocation6], 8192
    $region21: #{tpu_custom_call.1} parent=1 // pred_fallthru
      _
    %v41 = vld [vmem:[#allocation2] sm:$0xff]
    %v42 = vld [vmem:[#allocation5] sm:$0xff]
    %v43 = vld [vmem:[#allocation5 + $0x8] sm:$0xff]
    %v44 = vld [vmem:[#allocation5 + $0x10] sm:$0xff]
    %v45 = vld [vmem:[#allocation5 + $0x18] sm:$0xff]
    %v46 = vld [vmem:[#allocation5 + $0x20] sm:$0xff]
    %v47 = vld [vmem:[#allocation5 + $0x28] sm:$0xff]
    %v48 = vld [vmem:[#allocation5 + $0x30] sm:$0xff]
    %v49 = vld [vmem:[#allocation5 + $0x38] sm:$0xff]
    %v50 = vld [vmem:[#allocation5 + $0x40] sm:$0xff]
    %v51 = vld [vmem:[#allocation5 + $0x48] sm:$0xff]
    %v52 = vld [vmem:[#allocation5 + $0x50] sm:$0xff]
    %v53 = vld [vmem:[#allocation5 + $0x58] sm:$0xff]
    %v54 = vld [vmem:[#allocation5 + $0x60] sm:$0xff]
    %v55 = vld [vmem:[#allocation5 + $0x68] sm:$0xff]
    %v56 = vld [vmem:[#allocation5 + $0x70] sm:$0xff]
    %v57 = vld [vmem:[#allocation5 + $0x78] sm:$0xff]
    %v58 = vld [vmem:[#allocation5 + $0x80] sm:$0xff]
    %v59 = vld [vmem:[#allocation5 + $0x88] sm:$0xff]
    %v60 = vld [vmem:[#allocation5 + $0x90] sm:$0xff]
    %v61 = vld [vmem:[#allocation5 + $0x98] sm:$0xff]
    %v62 = vld [vmem:[#allocation5 + $0xa0] sm:$0xff]
    %v63 = vld [vmem:[#allocation5 + $0xa8] sm:$0xff]
    %v64 = vld [vmem:[#allocation5 + $0xb0] sm:$0xff]
    %v65 = vld [vmem:[#allocation5 + $0xb8] sm:$0xff]
    %v66 = vld [vmem:[#allocation5 + $0xc0] sm:$0xff]
    %v67 = vld [vmem:[#allocation5 + $0xc8] sm:$0xff]
    %v68 = vld [vmem:[#allocation5 + $0xd0] sm:$0xff]
    %v69 = vld [vmem:[#allocation5 + $0xd8] sm:$0xff]
    %v70 = vld [vmem:[#allocation5 + $0xe0] sm:$0xff]
    %v71 = vld [vmem:[#allocation5 + $0xe8] sm:$0xff]
    %v72 = vld [vmem:[#allocation5 + $0xf0] sm:$0xff]
    %v73 = vld [vmem:[#allocation5 + $0xf8] sm:$0xff]
    %v74 = vld [vmem:[#allocation5 + $0x100] sm:$0xff]
    %v75 = vld [vmem:[#allocation5 + $0x108] sm:$0xff]
    %v76 = vld [vmem:[#allocation5 + $0x110] sm:$0xff]
    %v77 = vld [vmem:[#allocation5 + $0x118] sm:$0xff]
    %v78 = vld [vmem:[#allocation5 + $0x120] sm:$0xff]
    %v79 = vld [vmem:[#allocation5 + $0x128] sm:$0xff]
    %v80 = vld [vmem:[#allocation5 + $0x130] sm:$0xff]
    %v81 = vld [vmem:[#allocation5 + $0x138] sm:$0xff]
    %v82 = vld [vmem:[#allocation5 + $0x140] sm:$0xff]
    %v83 = vld [vmem:[#allocation5 + $0x148] sm:$0xff]
    %v84 = vld [vmem:[#allocation5 + $0x150] sm:$0xff]
    %v85 = vld [vmem:[#allocation5 + $0x158] sm:$0xff]
    %v86 = vld [vmem:[#allocation5 + $0x160] sm:$0xff]
    %v87 = vld [vmem:[#allocation5 + $0x168] sm:$0xff]
    %v88 = vld [vmem:[#allocation5 + $0x170] sm:$0xff]
    %v89 = vld [vmem:[#allocation5 + $0x178] sm:$0xff]
    %v90 = vld [vmem:[#allocation5 + $0x180] sm:$0xff]
    %v91 = vld [vmem:[#allocation5 + $0x188] sm:$0xff]
    %v92 = vld [vmem:[#allocation5 + $0x190] sm:$0xff]
    %v93 = vld [vmem:[#allocation5 + $0x198] sm:$0xff]
    %v94 = vld [vmem:[#allocation5 + $0x1a0] sm:$0xff]
    %v95 = vld [vmem:[#allocation5 + $0x1a8] sm:$0xff]
    %v96 = vld [vmem:[#allocation5 + $0x1b0] sm:$0xff]
    %v97 = vld [vmem:[#allocation5 + $0x1b8] sm:$0xff]
    %v98 = vld [vmem:[#allocation5 + $0x1c0] sm:$0xff]
    %v99 = vld [vmem:[#allocation5 + $0x1c8] sm:$0xff]
    %v100 = vld [vmem:[#allocation5 + $0x1d0] sm:$0xff]
    %v101 = vld [vmem:[#allocation5 + $0x1d8] sm:$0xff]
    %v102 = vld [vmem:[#allocation5 + $0x1e0] sm:$0xff]
    %v103 = vld [vmem:[#allocation5 + $0x1e8] sm:$0xff]
    %v104 = vld [vmem:[#allocation5 + $0x1f0] sm:$0xff]
    %v105 = vld [vmem:[#allocation5 + $0x1f8] sm:$0xff]
    %v106 = vld [vmem:[%s2] sm:$0x1]
    %v108 = vlaneseq
    %v109 = vshrl.u32 %v108, 7
    %v110 = vsub.s32 0, %v109
    %v111 = vrot.slane %v106, %v110
    %v114 = vcombine.high %v41, %v41
    %v116 = vunpack.c.l.s4 1983009808
    %v117 = vunpack.c.0.s8 %v116
    %v118 = vlaneseq
    %v119 = vshrl.u32 %v118, 7
    %v120 = vsub.s32 %v117, %v119
    %v121 = vrot.slane %v41, %v120
    %v123 = vunpack.c.l.s4 1983009808
    %v124 = vunpack.c.0.s8 %v123
    %v125 = vlaneseq
    %v126 = vshrl.u32 %v125, 7
    %v127 = vsub.s32 %v124, %v126
    %v128 = vrot.slane %v114, %v127
    %v129 = vcombine.high %v121, %v121
    %v130 = vcombine.high %v128, %v128
    %135 = vmatprep.subr.mxu0 0.0
    %136 = vmatpush1.msra.mxu0 %v57
    %137 = vmatprep.subr.mxu0 0.0
    %138 = vmatpush1.msra.mxu0 %v56
    %139 = vmatprep.subr.mxu0 0.0
    %140 = vmatpush1.msra.mxu0 %v55
    %141 = vmatprep.subr.mxu0 0.0
    %142 = vmatpush1.msra.mxu0 %v54
    %143 = vmatprep.subr.mxu0 0.0
    %144 = vmatpush1.msra.mxu0 %v53
    %145 = vmatprep.subr.mxu0 0.0
    %146 = vmatpush1.msra.mxu0 %v52
    %147 = vmatprep.subr.mxu0 0.0
    %148 = vmatpush1.msra.mxu0 %v51
    %149 = vmatprep.subr.mxu0 0.0
    %150 = vmatpush1.msra.mxu0 %v50
    %151 = vmatprep.subr.mxu0 0.0
    %152 = vmatpush1.msra.mxu0 %v49
    %153 = vmatprep.subr.mxu0 0.0
    %154 = vmatpush1.msra.mxu0 %v48
    %155 = vmatprep.subr.mxu0 0.0
    %156 = vmatpush1.msra.mxu0 %v47
    %157 = vmatprep.subr.mxu0 0.0
    %158 = vmatpush1.msra.mxu0 %v46
    %159 = vmatprep.subr.mxu0 0.0
    %160 = vmatpush1.msra.mxu0 %v45
    %161 = vmatprep.subr.mxu0 0.0
    %162 = vmatpush1.msra.mxu0 %v44
    %163 = vmatprep.subr.mxu0 0.0
    %164 = vmatpush1.msra.mxu0 %v43
    %165 = vmatprep.subr.mxu0 0.0
    %166 = vmatpush1.msra.mxu0 %v42
    %167 = vmatprep.subr.mxu0 0.0
    %168 = vmatpush2.msra.mxu0 %v73
    %169 = vmatprep.subr.mxu0 0.0
    %170 = vmatpush2.msra.mxu0 %v72
    %171 = vmatprep.subr.mxu0 0.0
    %172 = vmatpush2.msra.mxu0 %v71
    %173 = vmatprep.subr.mxu0 0.0
    %174 = vmatpush2.msra.mxu0 %v70
    %175 = vmatprep.subr.mxu0 0.0
    %176 = vmatpush2.msra.mxu0 %v69
    %177 = vmatprep.subr.mxu0 0.0
    %178 = vmatpush2.msra.mxu0 %v68
    %179 = vmatprep.subr.mxu0 0.0
    %180 = vmatpush2.msra.mxu0 %v67
    %181 = vmatprep.subr.mxu0 0.0
    %182 = vmatpush2.msra.mxu0 %v66
    %183 = vmatprep.subr.mxu0 0.0
    %184 = vmatpush2.msra.mxu0 %v65
    %185 = vmatprep.subr.mxu0 0.0
    %186 = vmatpush2.msra.mxu0 %v64
    %187 = vmatprep.subr.mxu0 0.0
    %188 = vmatpush2.msra.mxu0 %v63
    %189 = vmatprep.subr.mxu0 0.0
    %190 = vmatpush2.msra.mxu0 %v62
    %191 = vmatprep.subr.mxu0 0.0
    %192 = vmatpush2.msra.mxu0 %v61
    %193 = vmatprep.subr.mxu0 0.0
    %194 = vmatpush2.msra.mxu0 %v60
    %195 = vmatprep.subr.mxu0 0.0
    %196 = vmatpush2.msra.mxu0 %v59
    %197 = vmatprep.subr.mxu0 0.0
    %198 = vmatpush2.msra.mxu0 %v58
    %199 = vmatprep.mubr.f32.mxu0 %v129
    %200 = vmatmul.mubr.f32.gmra.mxu0 %v121
    %v201 = vpop.f32.mrf.mxu0
    %v202 = vadd.f32 %v111, %v201
    %v203 = vpop.f32.mrf.mxu0
    %204 = vdwg.mxu0
    %205 = vmatprep.subr.mxu0 0.0
    %206 = vmatpush1.msra.mxu0 %v89
    %207 = vmatprep.subr.mxu0 0.0
    %208 = vmatpush1.msra.mxu0 %v88
    %209 = vmatprep.subr.mxu0 0.0
    %210 = vmatpush1.msra.mxu0 %v87
    %211 = vmatprep.subr.mxu0 0.0
    %212 = vmatpush1.msra.mxu0 %v86
    %213 = vmatprep.subr.mxu0 0.0
    %214 = vmatpush1.msra.mxu0 %v85
    %215 = vmatprep.subr.mxu0 0.0
    %216 = vmatpush1.msra.mxu0 %v84
    %217 = vmatprep.subr.mxu0 0.0
    %218 = vmatpush1.msra.mxu0 %v83
    %219 = vmatprep.subr.mxu0 0.0
    %220 = vmatpush1.msra.mxu0 %v82
    %221 = vmatprep.subr.mxu0 0.0
    %222 = vmatpush1.msra.mxu0 %v81
    %223 = vmatprep.subr.mxu0 0.0
    %224 = vmatpush1.msra.mxu0 %v80
    %225 = vmatprep.subr.mxu0 0.0
    %226 = vmatpush1.msra.mxu0 %v79
    %227 = vmatprep.subr.mxu0 0.0
    %228 = vmatpush1.msra.mxu0 %v78
    %229 = vmatprep.subr.mxu0 0.0
    %230 = vmatpush1.msra.mxu0 %v77
    %231 = vmatprep.subr.mxu0 0.0
    %232 = vmatpush1.msra.mxu0 %v76
    %233 = vmatprep.subr.mxu0 0.0
    %234 = vmatpush1.msra.mxu0 %v75
    %235 = vmatprep.subr.mxu0 0.0
    %236 = vmatpush1.msra.mxu0 %v74
    %237 = vmatprep.subr.mxu0 0.0
    %238 = vmatpush2.msra.mxu0 %v105
    %239 = vmatprep.subr.mxu0 0.0
    %240 = vmatpush2.msra.mxu0 %v104
    %241 = vmatprep.subr.mxu0 0.0
    %242 = vmatpush2.msra.mxu0 %v103
    %243 = vmatprep.subr.mxu0 0.0
    %244 = vmatpush2.msra.mxu0 %v102
    %245 = vmatprep.subr.mxu0 0.0
    %246 = vmatpush2.msra.mxu0 %v101
    %247 = vmatprep.subr.mxu0 0.0
    %248 = vmatpush2.msra.mxu0 %v100
    %249 = vmatprep.subr.mxu0 0.0
    %250 = vmatpush2.msra.mxu0 %v99
    %251 = vmatprep.subr.mxu0 0.0
    %252 = vmatpush2.msra.mxu0 %v98
    %253 = vmatprep.subr.mxu0 0.0
    %254 = vmatpush2.msra.mxu0 %v97
    %255 = vmatprep.subr.mxu0 0.0
    %256 = vmatpush2.msra.mxu0 %v96
    %257 = vmatprep.subr.mxu0 0.0
    %258 = vmatpush2.msra.mxu0 %v95
    %259 = vmatprep.subr.mxu0 0.0
    %260 = vmatpush2.msra.mxu0 %v94
    %261 = vmatprep.subr.mxu0 0.0
    %262 = vmatpush2.msra.mxu0 %v93
    %263 = vmatprep.subr.mxu0 0.0
    %264 = vmatpush2.msra.mxu0 %v92
    %265 = vmatprep.subr.mxu0 0.0
    %266 = vmatpush2.msra.mxu0 %v91
    %267 = vmatprep.subr.mxu0 0.0
    %268 = vmatpush2.msra.mxu0 %v90
    %269 = vmatprep.mubr.f32.mxu0 %v130
    %270 = vmatmul.mubr.f32.gmra.mxu0 %v128
    %v271 = vpop.f32.mrf.mxu0
    %v272 = vadd.f32 %v202, %v271
    %v273 = vpop.f32.mrf.mxu0
    %274 = vdwg.mxu0
    %v275 = vmax.f32 %v272, 0.0
    %276 = vst [vmem:[#allocation7] sm:$0x3] %v275
    // Predicated region
    $region22: #{tpu_custom_call.1} parent=1 // pred_check
      _
    $region23: #{tpu_custom_call.1} parent=1 // pred_check_branch
      %278 = sbr.rel (0) target = $region25
    $region24: #{tpu_custom_call.1} parent=1 // pred_region
      %s280 = ssub.s32 32, 32
      %281 = vsyncadd [#allocation4], %s280
      %s283 = sshll.u32 [#allocation7], 4
      %s284 = int_to_ptr.vmem [resolvable:$true] %s283
      %286 = dma.vmem_to_hbm [thread:$0]  %s284, 32, %s3, [#allocation4]
    $region25: #{tpu_custom_call.1} parent=1 // pred_fallthru
      _
    // Predicated region
    $region26: #{tpu_custom_call.1} parent=1 // pred_check
      _
    $region27: #{tpu_custom_call.1} parent=1 // pred_check_branch
      %288 = sbr.rel (0) target = $region29
    $region28: #{tpu_custom_call.1} parent=1 // pred_region
      %289 = dma.done [#allocation4], 32
    $region29: #{tpu_custom_call.1} parent=1 // pred_fallthru
      _
    %290 = vsyncpa [#allocation3], 1
    %291 = vsyncpa [#allocation6], 1
    %292 = vsyncpa [#allocation4], 1

</llo_original>
